<compile_context>
chip_gen: v7x
topology: tpu7x:2x2x1
jax: 0.10.0
libtpu: 0.0.40
codegen_flags: <defaults>
</compile_context>

<pallas_src>
import functools
import math

import numpy as np
import jax
import jax.numpy as jnp
from jax import lax
from jax.experimental import pallas as pl
from jax.experimental.pallas import tpu as pltpu


def _round_up(a: int, m: int) -> int:
    return (a + m - 1) // m * m


def _fused_club_kernel(x_ref, w_ref, b_ref, cm_ref, out_ref, acc_ref,
                       *, tile_n: int, n_real: int, n_pad: int):
    """One batch tile of the fused S_LineEstimator forward (scalar accumulated)."""
    tile = pl.program_id(0)

    @pl.when(tile == 0)
    def _init():
        acc_ref[0, 0] = jnp.float32(0.0)

    x = x_ref[...]                                              # (tile_n, d_pad) f32
    # mu_all = X_all @ W_big + b_big  (single Linear per estimator, fused over i)
    mu = jnp.dot(x, w_ref[...], preferred_element_type=jnp.float32) + b_ref[...]
    xc = x - cm_ref[...]                                        # centered targets
    prod = mu * xc                                              # (tile_n, d_pad)

    if n_pad != n_real:                                         # static branch: mask pad rows
        row = tile * tile_n + lax.broadcasted_iota(jnp.int32, (tile_n, 1), 0)
        prod = jnp.where(row < n_real, prod, jnp.float32(0.0))

    acc_ref[0, 0] += jnp.sum(prod)

    @pl.when(tile == pl.num_programs(0) - 1)
    def _finalize():
        out_ref[0, 0] = acc_ref[0, 0] * jnp.float32(1.0 / n_real)


def s_line_estimator_forward(samples, weights, biases, *, max_tile_n: int = 512):
    """S_LineEstimator.forward: sum_i CLUBMean_i(concat(samples \\ i), samples[i])."""
    n = int(samples[0].shape[0])
    dims = [int(s.shape[1]) for s in samples]
    d_total = int(sum(dims))
    d_pad = _round_up(d_total, 128)                 # lane-dense feature axis
    offs = np.concatenate([[0], np.cumsum(dims)]).astype(int)

    # Stack all samples once:  X_all[:, offs[i]:offs[i]+d_i] = samples[i]
    x_all = jnp.concatenate([s.astype(jnp.float32) for s in samples], axis=1)
    col_mean = jnp.sum(x_all, axis=0, keepdims=True) / float(n)           # (1, d_total)
    if d_pad > d_total:
        x_all = jnp.pad(x_all, ((0, 0), (0, d_pad - d_total)))
        col_mean = jnp.pad(col_mean, ((0, 0), (0, d_pad - d_total)))

    # Block weight: column block i holds estimator i's Linear, zero diagonal block.
    w_big = jnp.zeros((d_pad, d_pad), jnp.float32)
    b_big = jnp.zeros((1, d_pad), jnp.float32)
    for i, d in enumerate(dims):
        c0 = int(offs[i])
        w_i = weights[i].astype(jnp.float32)        # (d_total - d, d), rows = concat(\ i)
        w_big = w_big.at[:c0, c0:c0 + d].set(w_i[:c0, :])
        w_big = w_big.at[c0 + d:d_total, c0:c0 + d].set(w_i[c0:, :])
        b_big = b_big.at[0, c0:c0 + d].set(biases[i].astype(jnp.float32))

    # Batch tiling (sublane-aligned); padded rows are masked inside the kernel.
    tile_n = min(_round_up(n, 8), max_tile_n)
    n_pad = _round_up(n, tile_n)
    if n_pad > n:
        x_all = jnp.pad(x_all, ((0, n_pad - n), (0, 0)))
    num_tiles = n_pad // tile_n

    kernel = functools.partial(_fused_club_kernel,
                               tile_n=tile_n, n_real=n, n_pad=n_pad)

    out = pl.pallas_call(
        kernel,
        out_shape=jax.ShapeDtypeStruct((1, 1), jnp.float32),
        grid=(num_tiles,),
        in_specs=[
            pl.BlockSpec((tile_n, d_pad), lambda i: (i, 0)),   # batch-tiled X_all
            pl.BlockSpec((d_pad, d_pad), lambda i: (0, 0)),    # resident W_big
            pl.BlockSpec((1, d_pad), lambda i: (0, 0)),        # fused bias row
            pl.BlockSpec((1, d_pad), lambda i: (0, 0)),        # per-column means
        ],
        out_specs=pl.BlockSpec(memory_space=pltpu.MemorySpace.SMEM),
        scratch_shapes=[pltpu.SMEM((1, 1), jnp.float32)],
        compiler_params=pltpu.CompilerParams(
            dimension_semantics=("arbitrary",)),               # scalar accumulation axis
    )(x_all, w_big, b_big, col_mean)
    return out[0, 0]


def _reference_forward(samples, weights, biases):
    """Pure-JAX mirror of the original PyTorch forward (pairwise form)."""
    outs = []
    for i in range(len(samples)):
        y = samples[i]
        x = jnp.concatenate(samples[:i] + samples[i + 1:], axis=1)
        mu = x @ weights[i] + biases[i][None, :]
        positive = -0.5 * (mu - y) ** 2
        negative = -0.5 * jnp.mean((y[None, :, :] - mu[:, None, :]) ** 2, axis=1)
        outs.append(jnp.mean(positive.sum(-1) - negative.sum(-1)))
    return jnp.sum(jnp.stack(outs))


if __name__ == "__main__":
    # Small shapes: 3 variables with dims [4, 6, 6], batch N = 8.
    dims = [4, 6, 6]
    N = 8
    D_total = sum(dims)

    key = jax.random.PRNGKey(0)
    samples, weights, biases = [], [], []
    for i, d in enumerate(dims):
        k_i = jax.random.fold_in(key, i)
        k_s, k_w, k_b = jax.random.split(k_i, 3)
        samples.append(jax.random.normal(k_s, (N, d), dtype=jnp.float32))
        x_dim = D_total - d
        # deterministic "PyTorch-like" Linear init: U(-1/sqrt(in), 1/sqrt(in))
        bound = 1.0 / math.sqrt(x_dim)
        weights.append(jax.random.uniform(k_w, (x_dim, d), jnp.float32,
                                          minval=-bound, maxval=bound))
        biases.append(jax.random.uniform(k_b, (d,), jnp.float32,
                                         minval=-bound, maxval=bound))

    out = s_line_estimator_forward(samples, weights, biases)
    out = jax.block_until_ready(out)

    ref = _reference_forward(samples, weights, biases)
    assert jnp.isfinite(out), "non-finite kernel output"
    tol = 1e-3 * (1.0 + abs(float(ref)))
    assert abs(float(out) - float(ref)) < tol, (float(out), float(ref))

    print("KERNEL_OK")
</pallas_src>

<mosaic_0001>
module attributes {stable_mosaic.version = 11 : i64} {
  func.func @_fused_club_kernel(%arg0: i32, %arg1: memref<8x128xf32, #tpu.memory_space<vmem>>, %arg2: memref<128x128xf32, #tpu.memory_space<vmem>>, %arg3: memref<1x128xf32, #tpu.memory_space<vmem>>, %arg4: memref<1x128xf32, #tpu.memory_space<vmem>>, %arg5: memref<1x1xf32, #tpu.memory_space<smem>>, %arg6: memref<1x1xf32, #tpu.memory_space<smem>>) attributes {dimension_semantics = [#tpu.dimension_semantics<arbitrary>], iteration_bounds = array<i64: 1>, scalar_prefetch = 0 : i64, scratch_operands = 1 : i64, tpu.core_type = #tpu.core_type<tc>, window_params = [{transform_indices = @transform_0, window_bounds = array<i64: 8, 128>}, {pipeline_mode = #tpu.pipeline_mode<synchronous>, transform_indices = @transform_1, window_bounds = array<i64: 128, 128>}, {pipeline_mode = #tpu.pipeline_mode<synchronous>, transform_indices = @transform_2, window_bounds = array<i64: 1, 128>}, {pipeline_mode = #tpu.pipeline_mode<synchronous>, transform_indices = @transform_3, window_bounds = array<i64: 1, 128>}, {transform_indices = @transform_4, window_bounds = array<i64: 1, 1>}]} {
    %c0_i32 = arith.constant 0 : i32
    %0 = arith.cmpi eq, %arg0, %c0_i32 : i32
    %1 = arith.extui %0 : i1 to i32
    %c0_i32_0 = arith.constant 0 : i32
    %2 = arith.cmpi ne, %1, %c0_i32_0 : i32
    scf.if %2 {
      %cst_15 = arith.constant 0.000000e+00 : f32
      %c0_16 = arith.constant 0 : index
      %c0_17 = arith.constant 0 : index
      %23 = memref.load %arg6[%c0_16, %c0_17] : memref<1x1xf32, #tpu.memory_space<smem>>
      memref.store %cst_15, %arg6[%c0_16, %c0_17] : memref<1x1xf32, #tpu.memory_space<smem>>
    } else {
    }
    %c0 = arith.constant 0 : index
    %c0_1 = arith.constant 0 : index
    %3 = vector.load %arg1[%c0, %c0_1] : memref<8x128xf32, #tpu.memory_space<vmem>>, vector<8x128xf32>
    %c0_2 = arith.constant 0 : index
    %c0_3 = arith.constant 0 : index
    %4 = vector.load %arg2[%c0_2, %c0_3] : memref<128x128xf32, #tpu.memory_space<vmem>>, vector<128x128xf32>
    %cst = arith.constant dense<0.000000e+00> : vector<8x128xf32>
    %5 = tpu.matmul %3, %4, %cst {dimension_numbers = #tpu.dot_dimension_numbers<[1], [0], [0], [1], [0, 0, 1, 1], [], []>} : vector<8x128xf32>, vector<128x128xf32>, vector<8x128xf32> -> vector<8x128xf32>
    %c0_4 = arith.constant 0 : index
    %c0_5 = arith.constant 0 : index
    %6 = vector.load %arg3[%c0_4, %c0_5] : memref<1x128xf32, #tpu.memory_space<vmem>>, vector<1x128xf32>
    %7 = vector.broadcast %6 : vector<1x128xf32> to vector<8x128xf32>
    %8 = arith.addf %5, %7 : vector<8x128xf32>
    %c0_6 = arith.constant 0 : index
    %c0_7 = arith.constant 0 : index
    %9 = vector.load %arg4[%c0_6, %c0_7] : memref<1x128xf32, #tpu.memory_space<vmem>>, vector<1x128xf32>
    %10 = vector.broadcast %9 : vector<1x128xf32> to vector<8x128xf32>
    %11 = arith.subf %3, %10 : vector<8x128xf32>
    %12 = arith.mulf %8, %11 : vector<8x128xf32>
    %c0_8 = arith.constant 0 : index
    %c0_9 = arith.constant 0 : index
    %13 = memref.load %arg6[%c0_8, %c0_9] : memref<1x1xf32, #tpu.memory_space<smem>>
    %14 = vector.shape_cast %12 : vector<8x128xf32> to vector<1x8x128xf32>
    %cst_10 = arith.constant dense<0.000000e+00> : vector<1xf32>
    %15 = vector.multi_reduction <add>, %14, %cst_10 [1, 2] : vector<1x8x128xf32> to vector<1xf32>
    %16 = vector.shape_cast %15 : vector<1xf32> to vector<1x1x1xf32>
    %17 = vector.extract %16[0, 0, 0] : f32 from vector<1x1x1xf32>
    %18 = arith.addf %13, %17 : f32
    %c0_11 = arith.constant 0 : index
    %c0_12 = arith.constant 0 : index
    %19 = memref.load %arg6[%c0_11, %c0_12] : memref<1x1xf32, #tpu.memory_space<smem>>
    memref.store %18, %arg6[%c0_11, %c0_12] : memref<1x1xf32, #tpu.memory_space<smem>>
    %c0_i32_13 = arith.constant 0 : i32
    %20 = arith.cmpi eq, %arg0, %c0_i32_13 : i32
    %21 = arith.extui %20 : i1 to i32
    %c0_i32_14 = arith.constant 0 : i32
    %22 = arith.cmpi ne, %21, %c0_i32_14 : i32
    scf.if %22 {
      %c0_15 = arith.constant 0 : index
      %c0_16 = arith.constant 0 : index
      %23 = memref.load %arg6[%c0_15, %c0_16] : memref<1x1xf32, #tpu.memory_space<smem>>
      %cst_17 = arith.constant 1.250000e-01 : f32
      %24 = arith.mulf %23, %cst_17 : f32
      %c0_18 = arith.constant 0 : index
      %c0_19 = arith.constant 0 : index
      %25 = memref.load %arg5[%c0_18, %c0_19] : memref<1x1xf32, #tpu.memory_space<smem>>
      memref.store %24, %arg5[%c0_18, %c0_19] : memref<1x1xf32, #tpu.memory_space<smem>>
    } else {
    }
    return
  }
  func.func @transform_0(%arg0: i32) -> (i32, i32) {
    %c0_i32 = arith.constant 0 : i32
    %c0_i32_0 = arith.constant 0 : i32
    return %arg0, %c0_i32 : i32, i32
  }
  func.func @transform_1(%arg0: i32) -> (i32, i32) {
    %c0_i32 = arith.constant 0 : i32
    %c0_i32_0 = arith.constant 0 : i32
    %c0_i32_1 = arith.constant 0 : i32
    return %c0_i32, %c0_i32_0 : i32, i32
  }
  func.func @transform_2(%arg0: i32) -> (i32, i32) {
    %c0_i32 = arith.constant 0 : i32
    %c0_i32_0 = arith.constant 0 : i32
    %c0_i32_1 = arith.constant 0 : i32
    return %c0_i32, %c0_i32_0 : i32, i32
  }
  func.func @transform_3(%arg0: i32) -> (i32, i32) {
    %c0_i32 = arith.constant 0 : i32
    %c0_i32_0 = arith.constant 0 : i32
    %c0_i32_1 = arith.constant 0 : i32
    return %c0_i32, %c0_i32_0 : i32, i32
  }
  func.func @transform_4(%arg0: i32) -> (i32, i32) {
    %c0_i32 = arith.constant 0 : i32
    %c0_i32_0 = arith.constant 0 : i32
    %c0_i32_1 = arith.constant 0 : i32
    return %c0_i32, %c0_i32_0 : i32, i32
  }
}

</mosaic_0001>

<llo_original>
// kernel: tpu_custom_call.1
$region0: #{tpu_custom_call.1}
  #allocation0 [shape = 'u32[]', space=smem, size = 0x4, offset = 0x4, fixed_abs, tag = 'smem constant byte address 0x4 - core index']
  #allocation1 [shape = 'u32[144,128]{1,0:T(1,128)}', space=vmem, size = 0x12000, scoped, tag = 'internal scratch']
  #allocation2 [shape = 'f32[1,1]{1,0:T(1,128)}', space=smem, size = 0x200, scoped, tag = 'scratch operand']
  %s0 = inlined_call_operand.hbm [shape: f32[8,128], index: 0, kind: input, shape index: {}]
  %s1 = inlined_call_operand.hbm [shape: f32[128,128], index: 1, kind: input, shape index: {}]
  %s2 = inlined_call_operand.vmem [shape: f32[1,128], index: 2, kind: input, shape index: {}]
  %s3 = inlined_call_operand.vmem [shape: f32[1,128], index: 3, kind: input, shape index: {}]
  %s4 = inlined_call_operand.hbm [shape: f32[1,1], index: 4, kind: output, shape index: {}]
  %s5 = sld [smem:[#allocation0]]
  $region42: #{tpu_custom_call.1} parent=0
    _
  %s7 = ssub.s32 1, %s5
  %s8 = scalar_select 0, %s7, %s5
  $region1: #{tpu_custom_call.1} parent=0
    #allocation3 [shape = 'u8[4096]{0}', space=vmem, size = 0x1000, scoped, tag = 'input window, operand 0, single buffered']
    #allocation4 [shape = 's32[1]{0}', space=sflag, size = 0x4, scoped, tag = 'scoped memory for tpu_custom_call.1']
    #allocation5 [shape = 's32[1]{0}', space=sflag, size = 0x4, scoped, tag = 'scoped memory for tpu_custom_call.1']
    #allocation6 [shape = 'u8[65536]{0}', space=vmem, size = 0x10000, scoped, tag = 'input window, operand 1, single buffered']
    #allocation7 [shape = 's32[1]{0}', space=sflag, size = 0x4, scoped, tag = 'scoped memory for tpu_custom_call.1']
    #allocation8 [shape = 'u8[512]{0}', space=smem, size = 0x200, scoped, tag = 'output window, operand 0, single buffered']
    %9 = vsyncpa [#allocation4], 0
    %10 = vsyncpa [#allocation7], 0
    %11 = vsyncpa [#allocation5], 0
    // Predicated region
    $region2: #{tpu_custom_call.1} parent=1 // pred_check
      _
    $region3: #{tpu_custom_call.1} parent=1 // pred_check_branch
      %13 = sbr.rel (0) target = $region5
    $region4: #{tpu_custom_call.1} parent=1 // pred_region
      %s15 = ssub.s32 128, 128
      %16 = vsyncadd [#allocation4], %s15
      %s18 = sshll.u32 [#allocation3], 4
      %s19 = int_to_ptr.vmem [resolvable:$true] %s18
      %21 = dma.hbm_to_vmem [thread:$0]  %s0, 128, %s19, [#allocation4]
    $region5: #{tpu_custom_call.1} parent=1 // pred_fallthru
      _
    // Predicated region
    $region6: #{tpu_custom_call.1} parent=1 // pred_check
      _
    $region7: #{tpu_custom_call.1} parent=1 // pred_check_branch
      %23 = sbr.rel (0) target = $region9
    $region8: #{tpu_custom_call.1} parent=1 // pred_region
      %s25 = ssub.s32 2048, 2048
      %26 = vsyncadd [#allocation7], %s25
      %s27 = sshll.u32 [#allocation6], 4
      %s28 = int_to_ptr.vmem [resolvable:$true] %s27
      %33 = dma.hbm_to_vmem [thread:$0]  %s1, 2048, %s28, [#allocation7], 128, 128, 8
    $region9: #{tpu_custom_call.1} parent=1 // pred_fallthru
      _
    // Predicated region
    $region10: #{tpu_custom_call.1} parent=1 // pred_check
      _
    $region11: #{tpu_custom_call.1} parent=1 // pred_check_branch
      %35 = sbr.rel (0) target = $region13
    $region12: #{tpu_custom_call.1} parent=1 // pred_region
      _
    $region13: #{tpu_custom_call.1} parent=1 // pred_fallthru
      _
    // Predicated region
    $region14: #{tpu_custom_call.1} parent=1 // pred_check
      _
    $region15: #{tpu_custom_call.1} parent=1 // pred_check_branch
      %37 = sbr.rel (0) target = $region17
    $region16: #{tpu_custom_call.1} parent=1 // pred_region
      _
    $region17: #{tpu_custom_call.1} parent=1 // pred_fallthru
      _
    // Predicated region
    $region18: #{tpu_custom_call.1} parent=1 // pred_check
      _
    $region19: #{tpu_custom_call.1} parent=1 // pred_check_branch
      %39 = sbr.rel (0) target = $region21
    $region20: #{tpu_custom_call.1} parent=1 // pred_region
      %40 = dma.done [#allocation4], 128
    $region21: #{tpu_custom_call.1} parent=1 // pred_fallthru
      _
    // Predicated region
    $region22: #{tpu_custom_call.1} parent=1 // pred_check
      _
    $region23: #{tpu_custom_call.1} parent=1 // pred_check_branch
      %42 = sbr.rel (0) target = $region25
    $region24: #{tpu_custom_call.1} parent=1 // pred_region
      %43 = dma.done [#allocation7], 2048
    $region25: #{tpu_custom_call.1} parent=1 // pred_fallthru
      _
    %p44 = scmp.eq.s32.totalorder 0, 0
    // Predicated region
    $region26: #{tpu_custom_call.1} parent=1 // pred_check
      %p45 = pneg %p44
    $region27: #{tpu_custom_call.1} parent=1 // pred_check_branch
      %47 = sbr.rel (%p45) target = $region29
    $region28: #{tpu_custom_call.1} parent=1 // pred_region
      %s48 = scalar_lea.smem [#allocation2], 0
      %49 = sst [smem:[%s48]] 0.0
    $region29: #{tpu_custom_call.1} parent=1 // pred_fallthru
      _
    %v50 = vld [vmem:[#allocation3] sm:$0xff]
    %v51 = vld [vmem:[#allocation6] sm:$0xff]
    %v52 = vld [vmem:[#allocation6 + $0x8] sm:$0xff]
    %v53 = vld [vmem:[#allocation6 + $0x10] sm:$0xff]
    %v54 = vld [vmem:[#allocation6 + $0x18] sm:$0xff]
    %v55 = vld [vmem:[#allocation6 + $0x20] sm:$0xff]
    %v56 = vld [vmem:[#allocation6 + $0x28] sm:$0xff]
    %v57 = vld [vmem:[#allocation6 + $0x30] sm:$0xff]
    %v58 = vld [vmem:[#allocation6 + $0x38] sm:$0xff]
    %v59 = vld [vmem:[#allocation6 + $0x40] sm:$0xff]
    %v60 = vld [vmem:[#allocation6 + $0x48] sm:$0xff]
    %v61 = vld [vmem:[#allocation6 + $0x50] sm:$0xff]
    %v62 = vld [vmem:[#allocation6 + $0x58] sm:$0xff]
    %v63 = vld [vmem:[#allocation6 + $0x60] sm:$0xff]
    %v64 = vld [vmem:[#allocation6 + $0x68] sm:$0xff]
    %v65 = vld [vmem:[#allocation6 + $0x70] sm:$0xff]
    %v66 = vld [vmem:[#allocation6 + $0x78] sm:$0xff]
    %v67 = vld [vmem:[%s2] sm:$0x1]
    %v69 = vlaneseq
    %v70 = vshrl.u32 %v69, 7
    %v71 = vsub.s32 0, %v70
    %v72 = vrot.slane %v67, %v71
    %74 = vmatprep.subr.mxu0 0.0
    %75 = vmatpush1.msra.mxu0 %v51
    %76 = vmatprep.subr.mxu0 0.0
    %77 = vmatpush1.msra.mxu0 %v52
    %78 = vmatprep.subr.mxu0 0.0
    %79 = vmatpush1.msra.mxu0 %v53
    %80 = vmatprep.subr.mxu0 0.0
    %81 = vmatpush1.msra.mxu0 %v54
    %82 = vmatprep.subr.mxu0 0.0
    %83 = vmatpush1.msra.mxu0 %v55
    %84 = vmatprep.subr.mxu0 0.0
    %85 = vmatpush1.msra.mxu0 %v56
    %86 = vmatprep.subr.mxu0 0.0
    %87 = vmatpush1.msra.mxu0 %v57
    %88 = vmatprep.subr.mxu0 0.0
    %89 = vmatpush1.msra.mxu0 %v58
    %90 = vmatprep.subr.mxu0 0.0
    %91 = vmatpush1.msra.mxu0 %v59
    %92 = vmatprep.subr.mxu0 0.0
    %93 = vmatpush1.msra.mxu0 %v60
    %94 = vmatprep.subr.mxu0 0.0
    %95 = vmatpush1.msra.mxu0 %v61
    %96 = vmatprep.subr.mxu0 0.0
    %97 = vmatpush1.msra.mxu0 %v62
    %98 = vmatprep.subr.mxu0 0.0
    %99 = vmatpush1.msra.mxu0 %v63
    %100 = vmatprep.subr.mxu0 0.0
    %101 = vmatpush1.msra.mxu0 %v64
    %102 = vmatprep.subr.mxu0 0.0
    %103 = vmatpush1.msra.mxu0 %v65
    %104 = vmatprep.subr.mxu0 0.0
    %105 = vmatpush1.msra.mxu0 %v66
    %106 = vmatprep.subr.mxu0 0.0
    %107 = vmatpush1.msra.mxu0 0.0
    %108 = vmatprep.subr.mxu0 0.0
    %109 = vmatpush1.msra.mxu0 0.0
    %110 = vmatprep.subr.mxu0 0.0
    %111 = vmatpush1.msra.mxu0 0.0
    %112 = vmatprep.subr.mxu0 0.0
    %113 = vmatpush1.msra.mxu0 0.0
    %114 = vmatprep.subr.mxu0 0.0
    %115 = vmatpush1.msra.mxu0 0.0
    %116 = vmatprep.subr.mxu0 0.0
    %117 = vmatpush1.msra.mxu0 0.0
    %118 = vmatprep.subr.mxu0 0.0
    %119 = vmatpush1.msra.mxu0 0.0
    %120 = vmatprep.subr.mxu0 0.0
    %121 = vmatpush1.msra.mxu0 0.0
    %122 = vmatprep.subr.mxu0 0.0
    %123 = vmatpush1.msra.mxu0 0.0
    %124 = vmatprep.subr.mxu0 0.0
    %125 = vmatpush1.msra.mxu0 0.0
    %126 = vmatprep.subr.mxu0 0.0
    %127 = vmatpush1.msra.mxu0 0.0
    %128 = vmatprep.subr.mxu0 0.0
    %129 = vmatpush1.msra.mxu0 0.0
    %130 = vmatprep.subr.mxu0 0.0
    %131 = vmatpush1.msra.mxu0 0.0
    %132 = vmatprep.subr.mxu0 0.0
    %133 = vmatpush1.msra.mxu0 0.0
    %134 = vmatprep.subr.mxu0 0.0
    %135 = vmatpush1.msra.mxu0 0.0
    %136 = vmatprep.subr.mxu0 0.0
    %137 = vmatpush1.msra.mxu0 0.0
    %138 = vmatprep.mubr.f32.mxu0 0.0
    %139 = vmatmul.mubr.f32.gmra.mrb[0].mxu0 %v50
    %v140 = vpop.f32.mrb[0].mxu0
    %v141 = vadd.f32 %v72, %v140
    %v142 = vpop.f32.mrb[0].mxu0
    %143 = vdwg.mxu0
    %v144 = vld [vmem:[%s3] sm:$0x1]
    %v146 = vlaneseq
    %v147 = vshrl.u32 %v146, 7
    %v148 = vsub.s32 0, %v147
    %v149 = vrot.slane %v144, %v148
    %v151 = vsub.f32 %v50, %v149
    %v152 = vmul.f32 %v141, %v151
    %s153 = sld [smem:[#allocation2]]
    %154 = vadd.xlane.f32.xlu0 %v152
    %v155 = vpop.xlane.xlu0 %154
    %v156 = vrot.slane %v155, 4
    %v157 = vadd.f32 %v155, %v156
    %v158 = vrot.slane %v157, 2
    %v159 = vadd.f32 %v157, %v158
    %v160 = vrot.slane %v159, 1
    %v161 = vadd.f32 %v159, %v160
    %s162 = vtos %v161
    %s163 = sadd.f32 %s153, %s162
    %s164 = scalar_lea.smem [#allocation2], 0
    %165 = sst [smem:[%s164]] %s163
    // Predicated region
    $region30: #{tpu_custom_call.1} parent=1 // pred_check
      %p166 = pneg %p44
    $region31: #{tpu_custom_call.1} parent=1 // pred_check_branch
      %168 = sbr.rel (%p166) target = $region33
    $region32: #{tpu_custom_call.1} parent=1 // pred_region
      %s169 = sld [smem:[#allocation2]]
      %s170 = smul.f32 %s169, 0.125
      %s171 = scalar_lea.smem [#allocation8], 0
      %172 = sst [smem:[%s171]] %s170
    $region33: #{tpu_custom_call.1} parent=1 // pred_fallthru
      _
    // Predicated region
    $region34: #{tpu_custom_call.1} parent=1 // pred_check
      _
    $region35: #{tpu_custom_call.1} parent=1 // pred_check_branch
      %174 = sbr.rel (0) target = $region37
    $region36: #{tpu_custom_call.1} parent=1 // pred_region
      %s176 = ssub.s32 16, 16
      %177 = vsyncadd [#allocation5], %s176
      %180 = dma.smem_to_hbm [#allocation8], 16, %s4, [#allocation5]
    $region37: #{tpu_custom_call.1} parent=1 // pred_fallthru
      _
    // Predicated region
    $region38: #{tpu_custom_call.1} parent=1 // pred_check
      _
    $region39: #{tpu_custom_call.1} parent=1 // pred_check_branch
      %182 = sbr.rel (0) target = $region41
    $region40: #{tpu_custom_call.1} parent=1 // pred_region
      %183 = dma.done [#allocation5], 16
    $region41: #{tpu_custom_call.1} parent=1 // pred_fallthru
      _
    %184 = sfence
    %185 = vsyncpa [#allocation4], 1
    %186 = vsyncpa [#allocation7], 1
    %187 = vsyncpa [#allocation5], 1

</llo_original>
